<compile_context>
chip_gen: v7x
topology: tpu7x:2x2x1
jax: 0.10.0
libtpu: 0.0.40
codegen_flags: <defaults>
</compile_context>

<pallas_src>
import functools

import jax
import jax.numpy as jnp
from jax import lax
from jax.experimental import pallas as pl
from jax.experimental.pallas import tpu as pltpu

_LANE = 128
_MAX_BLOCK_ROWS = 2048   # (2048, 128) f32 = 1 MiB per input block
_NUM_SPLITS = 2          # leading "parallel" axis -> both TCs on v7x


def _dice_kernel(p_ref, t_ref, o_inter_ref, o_denom_ref,
                 acc_inter, acc_denom, *, n_valid, block_rows, bps):
    c = pl.program_id(0)          # core split
    i = pl.program_id(1)          # block within the split (reduction axis)

    @pl.when(i == 0)
    def _():
        acc_inter[...] = jnp.zeros_like(acc_inter)
        acc_denom[...] = jnp.zeros_like(acc_denom)

    # Load in native dtype, cast to f32 on the VPU (free for a mem-bound op).
    p = jax.nn.sigmoid(p_ref[...].astype(jnp.float32))
    t = t_ref[...].astype(jnp.float32)

    # Mask out everything past the true (unpadded) element count: the lane-pad
    # tail, the partial last block, and any clamped duplicate block assigned to
    # the tail split. n_valid / block_rows / bps are static, so this is a
    # handful of VPU ops with plenty of slot slack.
    block_idx = c * bps + i                      # intended (unclamped) block
    row = lax.broadcasted_iota(jnp.int32, p.shape, 0)
    lane = lax.broadcasted_iota(jnp.int32, p.shape, 1)
    flat = (block_idx * block_rows + row) * _LANE + lane
    mask = flat < n_valid

    # Per-lane vector accumulation in VMEM (no per-tile XLU reduction, no SMEM
    # scalar serialization).
    acc_inter[...] += jnp.where(mask, p * t, 0.0)
    acc_denom[...] += jnp.where(mask, p + t, 0.0)

    @pl.when(i == pl.num_programs(1) - 1)
    def _():
        # Single reduction over the row axis; the tiny remaining lane reduction
        # and the dice formula happen in the wrapper.
        inter_row = jnp.sum(acc_inter[...], axis=0, keepdims=True)   # (1, 128)
        denom_row = jnp.sum(acc_denom[...], axis=0, keepdims=True)   # (1, 128)
        o_inter_ref[...] = jnp.broadcast_to(inter_row[None], (1, 8, _LANE))
        o_denom_ref[...] = jnp.broadcast_to(denom_row[None], (1, 8, _LANE))


def dice_loss(preds, targets, smooth=1e-6, *,
              max_block_rows=_MAX_BLOCK_ROWS, num_splits=_NUM_SPLITS):
    """Pallas implementation of DiceLoss.forward(preds, targets)."""
    p = preds.reshape(-1)        # free reshape (contiguous view), native dtype
    t = targets.reshape(-1)
    n = p.shape[0]

    # Minimal pad only when the flat length is not a multiple of 128 (the pad
    # values are irrelevant — they are masked inside the kernel).
    lane_pad = (-n) % _LANE
    if lane_pad:
        p = jnp.pad(p, (0, lane_pad))
        t = jnp.pad(t, (0, lane_pad))

    rows = (n + lane_pad) // _LANE
    p2 = p.reshape(rows, _LANE)  # free reshape to a lane-dense slab
    t2 = t.reshape(rows, _LANE)

    # Block sizing: as large as allowed, but never larger than the array
    # (block_rows == rows is always a legal block shape).
    block_rows = min(max_block_rows, rows)
    nblocks = int(pl.cdiv(rows, block_rows))
    splits = num_splits if nblocks >= num_splits else 1
    bps = int(pl.cdiv(nblocks, splits))          # blocks per split

    if nblocks % splits == 0:
        def in_map(c, i):
            return (c * bps + i, 0)
    else:
        # Clamp so the DMA stays in bounds; the duplicate block of the tail
        # split is fully masked inside the kernel (contributes zero).
        def in_map(c, i):
            return (jnp.minimum(c * bps + i, nblocks - 1), 0)

    kernel = functools.partial(
        _dice_kernel, n_valid=n, block_rows=block_rows, bps=bps)

    out_inter, out_denom = pl.pallas_call(
        kernel,
        out_shape=(
            jax.ShapeDtypeStruct((splits, 8, _LANE), jnp.float32),
            jax.ShapeDtypeStruct((splits, 8, _LANE), jnp.float32),
        ),
        grid_spec=pltpu.PrefetchScalarGridSpec(
            num_scalar_prefetch=0,
            grid=(splits, bps),
            in_specs=[
                pl.BlockSpec((block_rows, _LANE), in_map),
                pl.BlockSpec((block_rows, _LANE), in_map),
            ],
            out_specs=[
                pl.BlockSpec((1, 8, _LANE), lambda c, i: (c, 0, 0)),
                pl.BlockSpec((1, 8, _LANE), lambda c, i: (c, 0, 0)),
            ],
            scratch_shapes=[
                pltpu.VMEM((block_rows, _LANE), jnp.float32),
                pltpu.VMEM((block_rows, _LANE), jnp.float32),
            ],
        ),
        compiler_params=pltpu.CompilerParams(
            dimension_semantics=("parallel", "arbitrary"),
        ),
    )(p2, t2)

    # Tiny cross-split / cross-lane combine + the dice formula (negligible).
    inter = jnp.sum(out_inter[:, 0, :])
    denom = jnp.sum(out_denom[:, 0, :])
    dice = (2.0 * inter + smooth) / (denom + smooth)
    return 1.0 - dice


def _dice_loss_ref(preds, targets, smooth=1e-6):
    p = jax.nn.sigmoid(preds.astype(jnp.float32)).reshape(-1)
    t = targets.astype(jnp.float32).reshape(-1)
    inter = jnp.sum(p * t)
    dice = (2.0 * inter + smooth) / (jnp.sum(p) + jnp.sum(t) + smooth)
    return 1.0 - dice


if __name__ == "__main__":
    key = jax.random.PRNGKey(0)
    k1, k2, k3, k4, k5, k6 = jax.random.split(key, 6)

    # 1) Primary shape consistent with the segmentation head: NCHW (2, 4, 16, 16).
    preds = jax.random.normal(k1, (2, 4, 16, 16), dtype=jnp.float32)
    targets = jax.random.bernoulli(k2, 0.3, (2, 4, 16, 16)).astype(jnp.float32)
    loss = jax.block_until_ready(dice_loss(preds, targets))
    ref = _dice_loss_ref(preds, targets)
    assert jnp.allclose(loss, ref, atol=1e-5, rtol=1e-5), (loss, ref)

    # 2) bf16 logits streamed natively (no wrapper-side f32 cast).
    preds_bf = jax.random.normal(k3, (2, 4, 16, 16), dtype=jnp.bfloat16)
    loss_bf = jax.block_until_ready(dice_loss(preds_bf, targets))
    ref_bf = _dice_loss_ref(preds_bf, targets)
    assert jnp.allclose(loss_bf, ref_bf, atol=1e-5, rtol=1e-5), (loss_bf, ref_bf)

    # 3) Multi-block grid + 2-way split + partial tail block + clamped
    #    duplicate block (exercised by capping the block size).
    preds3 = jax.random.normal(k4, (2, 4, 30, 40), dtype=jnp.float32)
    targets3 = jax.random.bernoulli(k5, 0.3, (2, 4, 30, 40)).astype(jnp.float32)
    loss3 = jax.block_until_ready(dice_loss(preds3, targets3, max_block_rows=16))
    ref3 = _dice_loss_ref(preds3, targets3)
    assert jnp.allclose(loss3, ref3, atol=1e-5, rtol=1e-5), (loss3, ref3)

    # 4) Flat length not a multiple of 128 (minimal lane pad + in-kernel mask).
    preds4 = jax.random.normal(k6, (2, 3, 10, 10), dtype=jnp.float32)
    targets4 = jax.random.bernoulli(k2, 0.5, (2, 3, 10, 10)).astype(jnp.float32)
    loss4 = jax.block_until_ready(dice_loss(preds4, targets4))
    ref4 = _dice_loss_ref(preds4, targets4)
    assert jnp.allclose(loss4, ref4, atol=1e-5, rtol=1e-5), (loss4, ref4)

    print("KERNEL_OK")
</pallas_src>

<mosaic_0001>
module attributes {stable_mosaic.version = 11 : i64} {
  func.func @_dice_kernel(%arg0: i32, %arg1: i32, %arg2: memref<16x128xf32, #tpu.memory_space<vmem>>, %arg3: memref<16x128xf32, #tpu.memory_space<vmem>>, %arg4: memref<1x8x128xf32, #tpu.memory_space<vmem>>, %arg5: memref<1x8x128xf32, #tpu.memory_space<vmem>>, %arg6: memref<16x128xf32, #tpu.memory_space<vmem>>, %arg7: memref<16x128xf32, #tpu.memory_space<vmem>>) attributes {dimension_semantics = [#tpu.dimension_semantics<parallel>, #tpu.dimension_semantics<arbitrary>], iteration_bounds = array<i64: 1, 1>, scalar_prefetch = 0 : i64, scratch_operands = 2 : i64, tpu.core_type = #tpu.core_type<tc>, window_params = [{transform_indices = @transform_0, window_bounds = array<i64: 16, 128>}, {transform_indices = @transform_1, window_bounds = array<i64: 16, 128>}, {transform_indices = @transform_2, window_bounds = array<i64: 1, 8, 128>}, {transform_indices = @transform_3, window_bounds = array<i64: 1, 8, 128>}]} {
    %c0_i32 = arith.constant 0 : i32
    %0 = arith.cmpi eq, %arg1, %c0_i32 : i32
    %1 = arith.extui %0 : i1 to i32
    %c0_i32_0 = arith.constant 0 : i32
    %2 = arith.cmpi ne, %1, %c0_i32_0 : i32
    scf.if %2 {
      %cst_16 = arith.constant 0.000000e+00 : f32
      %37 = vector.broadcast %cst_16 : f32 to vector<16x128xf32>
      %c0_17 = arith.constant 0 : index
      %c0_18 = arith.constant 0 : index
      %38 = vector.load %arg6[%c0_17, %c0_18] : memref<16x128xf32, #tpu.memory_space<vmem>>, vector<16x128xf32>
      tpu.vector_store %arg6[%c0_17, %c0_18], %37 {strides = array<i32>} : memref<16x128xf32, #tpu.memory_space<vmem>>, vector<16x128xf32>,
      %cst_19 = arith.constant 0.000000e+00 : f32
      %39 = vector.broadcast %cst_19 : f32 to vector<16x128xf32>
      %c0_20 = arith.constant 0 : index
      %c0_21 = arith.constant 0 : index
      %40 = vector.load %arg7[%c0_20, %c0_21] : memref<16x128xf32, #tpu.memory_space<vmem>>, vector<16x128xf32>
      tpu.vector_store %arg7[%c0_20, %c0_21], %39 {strides = array<i32>} : memref<16x128xf32, #tpu.memory_space<vmem>>, vector<16x128xf32>,
    } else {
    }
    %c0 = arith.constant 0 : index
    %c0_1 = arith.constant 0 : index
    %3 = vector.load %arg2[%c0, %c0_1] : memref<16x128xf32, #tpu.memory_space<vmem>>, vector<16x128xf32>
    %4 = arith.negf %3 : vector<16x128xf32>
    %5 = math.exp %4 : vector<16x128xf32>
    %cst = arith.constant 1.000000e+00 : f32
    %6 = vector.broadcast %cst : f32 to vector<16x128xf32>
    %7 = arith.addf %6, %5 : vector<16x128xf32>
    %8 = arith.divf %6, %7 : vector<16x128xf32>
    %c0_2 = arith.constant 0 : index
    %c0_3 = arith.constant 0 : index
    %9 = vector.load %arg3[%c0_2, %c0_3] : memref<16x128xf32, #tpu.memory_space<vmem>>, vector<16x128xf32>
    %c1_i32 = arith.constant 1 : i32
    %10 = arith.muli %arg0, %c1_i32 : i32
    %11 = arith.addi %10, %arg1 : i32
    %12 = tpu.iota {dimensions = array<i32: 0>} : vector<16x128xi32>
    %13 = tpu.iota {dimensions = array<i32: 1>} : vector<16x128xi32>
    %c16_i32 = arith.constant 16 : i32
    %14 = arith.muli %11, %c16_i32 : i32
    %15 = vector.broadcast %14 : i32 to vector<16x128xi32>
    %16 = arith.addi %15, %12 : vector<16x128xi32>
    %c128_i32 = arith.constant 128 : i32
    %17 = vector.broadcast %c128_i32 : i32 to vector<16x128xi32>
    %18 = arith.muli %16, %17 : vector<16x128xi32>
    %19 = arith.addi %18, %13 : vector<16x128xi32>
    %c2048_i32 = arith.constant 2048 : i32
    %20 = vector.broadcast %c2048_i32 : i32 to vector<16x128xi32>
    %21 = arith.cmpi slt, %19, %20 : vector<16x128xi32>
    %c0_4 = arith.constant 0 : index
    %c0_5 = arith.constant 0 : index
    %22 = vector.load %arg6[%c0_4, %c0_5] : memref<16x128xf32, #tpu.memory_space<vmem>>, vector<16x128xf32>
    %23 = arith.mulf %8, %9 : vector<16x128xf32>
    %cst_6 = arith.constant 0.000000e+00 : f32
    %24 = vector.broadcast %cst_6 : f32 to vector<16x128xf32>
    %25 = arith.select %21, %23, %24 : vector<16x128xi1>, vector<16x128xf32>
    %26 = arith.addf %22, %25 : vector<16x128xf32>
    %c0_7 = arith.constant 0 : index
    %c0_8 = arith.constant 0 : index
    %27 = vector.load %arg6[%c0_7, %c0_8] : memref<16x128xf32, #tpu.memory_space<vmem>>, vector<16x128xf32>
    tpu.vector_store %arg6[%c0_7, %c0_8], %26 {strides = array<i32>} : memref<16x128xf32, #tpu.memory_space<vmem>>, vector<16x128xf32>,
    %c0_9 = arith.constant 0 : index
    %c0_10 = arith.constant 0 : index
    %28 = vector.load %arg7[%c0_9, %c0_10] : memref<16x128xf32, #tpu.memory_space<vmem>>, vector<16x128xf32>
    %29 = arith.addf %8, %9 : vector<16x128xf32>
    %cst_11 = arith.constant 0.000000e+00 : f32
    %30 = vector.broadcast %cst_11 : f32 to vector<16x128xf32>
    %31 = arith.select %21, %29, %30 : vector<16x128xi1>, vector<16x128xf32>
    %32 = arith.addf %28, %31 : vector<16x128xf32>
    %c0_12 = arith.constant 0 : index
    %c0_13 = arith.constant 0 : index
    %33 = vector.load %arg7[%c0_12, %c0_13] : memref<16x128xf32, #tpu.memory_space<vmem>>, vector<16x128xf32>
    tpu.vector_store %arg7[%c0_12, %c0_13], %32 {strides = array<i32>} : memref<16x128xf32, #tpu.memory_space<vmem>>, vector<16x128xf32>,
    %c0_i32_14 = arith.constant 0 : i32
    %34 = arith.cmpi eq, %arg1, %c0_i32_14 : i32
    %35 = arith.extui %34 : i1 to i32
    %c0_i32_15 = arith.constant 0 : i32
    %36 = arith.cmpi ne, %35, %c0_i32_15 : i32
    scf.if %36 {
      %c0_16 = arith.constant 0 : index
      %c0_17 = arith.constant 0 : index
      %37 = vector.load %arg6[%c0_16, %c0_17] : memref<16x128xf32, #tpu.memory_space<vmem>>, vector<16x128xf32>
      %cst_18 = arith.constant dense<0.000000e+00> : vector<128xf32>
      %38 = vector.multi_reduction <add>, %37, %cst_18 [0] : vector<16x128xf32> to vector<128xf32>
      %39 = vector.shape_cast %38 : vector<128xf32> to vector<1x128xf32>
      %c0_19 = arith.constant 0 : index
      %c0_20 = arith.constant 0 : index
      %40 = vector.load %arg7[%c0_19, %c0_20] : memref<16x128xf32, #tpu.memory_space<vmem>>, vector<16x128xf32>
      %cst_21 = arith.constant dense<0.000000e+00> : vector<128xf32>
      %41 = vector.multi_reduction <add>, %40, %cst_21 [0] : vector<16x128xf32> to vector<128xf32>
      %42 = vector.shape_cast %41 : vector<128xf32> to vector<1x128xf32>
      %43 = vector.shape_cast %39 : vector<1x128xf32> to vector<1x1x128xf32>
      %44 = vector.shape_cast %43 : vector<1x1x128xf32> to vector<1x1x128xf32>
      %45 = vector.broadcast %44 : vector<1x1x128xf32> to vector<1x8x128xf32>
      %c0_22 = arith.constant 0 : index
      %c0_23 = arith.constant 0 : index
      %c0_24 = arith.constant 0 : index
      %46 = vector.load %arg4[%c0_22, %c0_23, %c0_24] : memref<1x8x128xf32, #tpu.memory_space<vmem>>, vector<1x8x128xf32>
      tpu.vector_store %arg4[%c0_22, %c0_23, %c0_24], %45 {strides = array<i32>} : memref<1x8x128xf32, #tpu.memory_space<vmem>>, vector<1x8x128xf32>,
      %47 = vector.shape_cast %42 : vector<1x128xf32> to vector<1x1x128xf32>
      %48 = vector.shape_cast %47 : vector<1x1x128xf32> to vector<1x1x128xf32>
      %49 = vector.broadcast %48 : vector<1x1x128xf32> to vector<1x8x128xf32>
      %c0_25 = arith.constant 0 : index
      %c0_26 = arith.constant 0 : index
      %c0_27 = arith.constant 0 : index
      %50 = vector.load %arg5[%c0_25, %c0_26, %c0_27] : memref<1x8x128xf32, #tpu.memory_space<vmem>>, vector<1x8x128xf32>
      tpu.vector_store %arg5[%c0_25, %c0_26, %c0_27], %49 {strides = array<i32>} : memref<1x8x128xf32, #tpu.memory_space<vmem>>, vector<1x8x128xf32>,
    } else {
    }
    return
  }
  func.func @transform_0(%arg0: i32, %arg1: i32) -> (i32, i32) {
    %c1_i32 = arith.constant 1 : i32
    %0 = arith.muli %arg0, %c1_i32 : i32
    %1 = arith.addi %0, %arg1 : i32
    %c0_i32 = arith.constant 0 : i32
    %c0_i32_0 = arith.constant 0 : i32
    return %1, %c0_i32 : i32, i32
  }
  func.func @transform_1(%arg0: i32, %arg1: i32) -> (i32, i32) {
    %c1_i32 = arith.constant 1 : i32
    %0 = arith.muli %arg0, %c1_i32 : i32
    %1 = arith.addi %0, %arg1 : i32
    %c0_i32 = arith.constant 0 : i32
    %c0_i32_0 = arith.constant 0 : i32
    return %1, %c0_i32 : i32, i32
  }
  func.func @transform_2(%arg0: i32, %arg1: i32) -> (i32, i32, i32) {
    %c0_i32 = arith.constant 0 : i32
    %c0_i32_0 = arith.constant 0 : i32
    %c0_i32_1 = arith.constant 0 : i32
    return %arg0, %c0_i32, %c0_i32_0 : i32, i32, i32
  }
  func.func @transform_3(%arg0: i32, %arg1: i32) -> (i32, i32, i32) {
    %c0_i32 = arith.constant 0 : i32
    %c0_i32_0 = arith.constant 0 : i32
    %c0_i32_1 = arith.constant 0 : i32
    return %arg0, %c0_i32, %c0_i32_0 : i32, i32, i32
  }
}

</mosaic_0001>

<llo_original>
// kernel: tpu_custom_call.1
$region0: #{tpu_custom_call.1}
  #allocation0 [shape = 'u32[]', space=smem, size = 0x4, offset = 0x4, fixed_abs, tag = 'smem constant byte address 0x4 - core index']
  #allocation1 [shape = 'u32[144,128]{1,0:T(1,128)}', space=vmem, size = 0x12000, scoped, tag = 'internal scratch']
  #allocation2 [shape = 'f32[16,128]{1,0:T(8,128)}', space=vmem, size = 0x2000, scoped, tag = 'scratch operand']
  #allocation3 [shape = 'f32[16,128]{1,0:T(8,128)}', space=vmem, size = 0x2000, scoped, tag = 'scratch operand']
  %s0 = inlined_call_operand.hbm [shape: f32[16,128], index: 0, kind: input, shape index: {}]
  %s1 = inlined_call_operand.hbm [shape: f32[16,128], index: 1, kind: input, shape index: {}]
  %s2 = inlined_call_operand.hbm [shape: f32[1,8,128], index: 2, kind: output, shape index: {0}]
  %s3 = inlined_call_operand.hbm [shape: f32[1,8,128], index: 3, kind: output, shape index: {1}]
  %4 = xla_tuple %s2, %s3
  %s5 = sld [smem:[#allocation0]]
  $region42: #{tpu_custom_call.1} parent=0
    _
  %s7 = ssub.s32 1, %s5
  %s8 = scalar_select 0, %s7, %s5
  $region1: #{tpu_custom_call.1} parent=0
    #allocation4 [shape = 'u8[8192]{0}', space=vmem, size = 0x2000, scoped, tag = 'input window, operand 0, single buffered']
    #allocation5 [shape = 's32[1]{0}', space=sflag, size = 0x4, scoped, tag = 'scoped memory for tpu_custom_call.1']
    #allocation6 [shape = 's32[1]{0}', space=sflag, size = 0x4, scoped, tag = 'scoped memory for tpu_custom_call.1']
    #allocation7 [shape = 'u8[8192]{0}', space=vmem, size = 0x2000, scoped, tag = 'input window, operand 1, single buffered']
    #allocation8 [shape = 's32[1]{0}', space=sflag, size = 0x4, scoped, tag = 'scoped memory for tpu_custom_call.1']
    #allocation9 [shape = 'u8[4096]{0}', space=vmem, size = 0x1000, scoped, tag = 'output window, operand 0, single buffered']
    #allocation10 [shape = 'u8[4096]{0}', space=vmem, size = 0x1000, scoped, tag = 'output window, operand 1, single buffered']
    #allocation11 [shape = 's32[1]{0}', space=sflag, size = 0x4, scoped, tag = 'scoped memory for tpu_custom_call.1']
    %9 = vsyncpa [#allocation5], 0
    %10 = vsyncpa [#allocation8], 0
    %11 = vsyncpa [#allocation6], 0
    %12 = vsyncpa [#allocation11], 0
    // Predicated region
    $region2: #{tpu_custom_call.1} parent=1 // pred_check
      _
    $region3: #{tpu_custom_call.1} parent=1 // pred_check_branch
      %14 = sbr.rel (0) target = $region5
    $region4: #{tpu_custom_call.1} parent=1 // pred_region
      %s15 = sadd.s32 0, 0
      %s16 = smul.u32 2, %s15
      %s18 = ssub.s32 256, 256
      %19 = vsyncadd [#allocation5], %s18
      %s20 = smul.addr %s16, 128
      %s21 = scalar_lea.hbm %s0, %s20
      %s22 = sshll.u32 [#allocation4], 4
      %s23 = int_to_ptr.vmem [resolvable:$true] %s22
      %28 = dma.hbm_to_vmem [thread:$0]  %s21, 256, %s23, [#allocation5], 128, 128, 8
    $region5: #{tpu_custom_call.1} parent=1 // pred_fallthru
      _
    // Predicated region
    $region6: #{tpu_custom_call.1} parent=1 // pred_check
      _
    $region7: #{tpu_custom_call.1} parent=1 // pred_check_branch
      %30 = sbr.rel (0) target = $region9
    $region8: #{tpu_custom_call.1} parent=1 // pred_region
      %s31 = sadd.s32 0, 0
      %s32 = smul.u32 2, %s31
      %s34 = ssub.s32 256, 256
      %35 = vsyncadd [#allocation8], %s34
      %s36 = smul.addr %s32, 128
      %s37 = scalar_lea.hbm %s1, %s36
      %s38 = sshll.u32 [#allocation7], 4
      %s39 = int_to_ptr.vmem [resolvable:$true] %s38
      %44 = dma.hbm_to_vmem [thread:$0]  %s37, 256, %s39, [#allocation8], 128, 128, 8
    $region9: #{tpu_custom_call.1} parent=1 // pred_fallthru
      _
    // Predicated region
    $region10: #{tpu_custom_call.1} parent=1 // pred_check
      _
    $region11: #{tpu_custom_call.1} parent=1 // pred_check_branch
      %46 = sbr.rel (0) target = $region13
    $region12: #{tpu_custom_call.1} parent=1 // pred_region
      %47 = dma.done [#allocation5], 256
    $region13: #{tpu_custom_call.1} parent=1 // pred_fallthru
      _
    // Predicated region
    $region14: #{tpu_custom_call.1} parent=1 // pred_check
      _
    $region15: #{tpu_custom_call.1} parent=1 // pred_check_branch
      %49 = sbr.rel (0) target = $region17
    $region16: #{tpu_custom_call.1} parent=1 // pred_region
      %50 = dma.done [#allocation8], 256
    $region17: #{tpu_custom_call.1} parent=1 // pred_fallthru
      _
    %s51 = sadd.s32 0, 0
    %s52 = smul.u32 2, %s51
    %s53 = sadd.s32 0, 0
    %s54 = smul.u32 2, %s53
    %p55 = scmp.eq.s32.totalorder 0, 0
    // Predicated region
    $region18: #{tpu_custom_call.1} parent=1 // pred_check
      %p56 = pneg %p55
    $region19: #{tpu_custom_call.1} parent=1 // pred_check_branch
      %58 = sbr.rel (%p56) target = $region21
    $region20: #{tpu_custom_call.1} parent=1 // pred_region
      %59 = vst [vmem:[#allocation2] sm:$0xff] 0.0
      %60 = vst [vmem:[#allocation2 + $0x8] sm:$0xff] 0.0
      %61 = vst [vmem:[#allocation3] sm:$0xff] 0.0
      %62 = vst [vmem:[#allocation3 + $0x8] sm:$0xff] 0.0
    $region21: #{tpu_custom_call.1} parent=1 // pred_fallthru
      _
    %v63 = vld [vmem:[#allocation4] sm:$0xff]
    %v64 = vld [vmem:[#allocation4 + $0x8] sm:$0xff]
    %v65 = vxor.u32 %v63, 2147483648
    %v66 = vxor.u32 %v64, 2147483648
    %v67 = vmul.f32 %v65, 1.442695
    %v68 = vpow.pop %v67
    %v69 = vmul.f32 %v66, 1.442695
    %v70 = vpow.pop %v69
    %v71 = vadd.f32 %v68, 1.0
    %v72 = vadd.f32 %v70, 1.0
    %v73 = vrcp.pop %v71
    %v74 = vmul.f32 1.0, %v73
    %v75 = vrcp.pop %v72
    %v76 = vmul.f32 1.0, %v75
    %v77 = vld [vmem:[#allocation7] sm:$0xff]
    %v78 = vld [vmem:[#allocation7 + $0x8] sm:$0xff]
    %s79 = sadd.s32 0, 0
    %v80 = vlaneseq
    %v81 = vshrl.u32 %v80, 7
    %v82 = vadd.s32 %v81, 8
    %v83 = vlaneseq
    %v84 = vand.u32 %v83, 127
    %s85 = smul.u32 %s79, 16
    %v86 = vstv %s85
    %v87 = vadd.s32 %v86, %v81
    %v88 = vadd.s32 %v86, %v82
    %v89 = vmul.u32 %v87, 128
    %v90 = vmul.u32 %v88, 128
    %v91 = vadd.s32 %v89, %v84
    %v92 = vadd.s32 %v90, %v84
    %vm93 = vcmp.lt.s32.totalorder %v91, 2048
    %vm94 = vcmp.lt.s32.totalorder %v92, 2048
    %v95 = vld [vmem:[#allocation2] sm:$0xff]
    %v96 = vld [vmem:[#allocation2 + $0x8] sm:$0xff]
    %v97 = vmul.f32 %v74, %v77
    %v98 = vmul.f32 %v76, %v78
    %v99 = vsel %vm93, %v97, 0.0
    %v100 = vsel %vm94, %v98, 0.0
    %v101 = vadd.f32 %v95, %v99
    %v102 = vadd.f32 %v96, %v100
    %103 = vst [vmem:[#allocation2] sm:$0xff] %v101
    %104 = vst [vmem:[#allocation2 + $0x8] sm:$0xff] %v102
    %v105 = vld [vmem:[#allocation3] sm:$0xff]
    %v106 = vld [vmem:[#allocation3 + $0x8] sm:$0xff]
    %v107 = vadd.f32 %v74, %v77
    %v108 = vadd.f32 %v76, %v78
    %v109 = vsel %vm93, %v107, 0.0
    %v110 = vsel %vm94, %v108, 0.0
    %v111 = vadd.f32 %v105, %v109
    %v112 = vadd.f32 %v106, %v110
    %113 = vst [vmem:[#allocation3] sm:$0xff] %v111
    %114 = vst [vmem:[#allocation3 + $0x8] sm:$0xff] %v112
    // Predicated region
    $region22: #{tpu_custom_call.1} parent=1 // pred_check
      %p115 = pneg %p55
    $region23: #{tpu_custom_call.1} parent=1 // pred_check_branch
      %117 = sbr.rel (%p115) target = $region25
    $region24: #{tpu_custom_call.1} parent=1 // pred_region
      %v118 = vld [vmem:[#allocation2] sm:$0xff]
      %v119 = vld [vmem:[#allocation2 + $0x8] sm:$0xff]
      %v120 = vadd.f32 %v118, %v119
      %v121 = vrot.slane %v120, 4
      %v122 = vadd.f32 %v120, %v121
      %v123 = vrot.slane %v122, 2
      %v124 = vadd.f32 %v122, %v123
      %v125 = vrot.slane %v124, 1
      %v126 = vadd.f32 %v124, %v125
      %v127 = vld [vmem:[#allocation3] sm:$0xff]
      %v128 = vld [vmem:[#allocation3 + $0x8] sm:$0xff]
      %v129 = vadd.f32 %v127, %v128
      %v130 = vrot.slane %v129, 4
      %v131 = vadd.f32 %v129, %v130
      %v132 = vrot.slane %v131, 2
      %v133 = vadd.f32 %v131, %v132
      %v134 = vrot.slane %v133, 1
      %v135 = vadd.f32 %v133, %v134
      %136 = vst [vmem:[#allocation9] sm:$0xff] %v126
      %137 = vst [vmem:[#allocation10] sm:$0xff] %v135
    $region25: #{tpu_custom_call.1} parent=1 // pred_fallthru
      _
    // Predicated region
    $region26: #{tpu_custom_call.1} parent=1 // pred_check
      _
    $region27: #{tpu_custom_call.1} parent=1 // pred_check_branch
      %139 = sbr.rel (0) target = $region29
    $region28: #{tpu_custom_call.1} parent=1 // pred_region
      %s141 = ssub.s32 128, 128
      %142 = vsyncadd [#allocation6], %s141
      %s144 = sshll.u32 [#allocation9], 4
      %s145 = int_to_ptr.vmem [resolvable:$true] %s144
      %147 = dma.vmem_to_hbm [thread:$0]  %s145, 128, %s2, [#allocation6]
    $region29: #{tpu_custom_call.1} parent=1 // pred_fallthru
      _
    // Predicated region
    $region30: #{tpu_custom_call.1} parent=1 // pred_check
      _
    $region31: #{tpu_custom_call.1} parent=1 // pred_check_branch
      %149 = sbr.rel (0) target = $region33
    $region32: #{tpu_custom_call.1} parent=1 // pred_region
      %s151 = ssub.s32 128, 128
      %152 = vsyncadd [#allocation11], %s151
      %s154 = sshll.u32 [#allocation10], 4
      %s155 = int_to_ptr.vmem [resolvable:$true] %s154
      %157 = dma.vmem_to_hbm [thread:$0]  %s155, 128, %s3, [#allocation11]
    $region33: #{tpu_custom_call.1} parent=1 // pred_fallthru
      _
    // Predicated region
    $region34: #{tpu_custom_call.1} parent=1 // pred_check
      _
    $region35: #{tpu_custom_call.1} parent=1 // pred_check_branch
      %159 = sbr.rel (0) target = $region37
    $region36: #{tpu_custom_call.1} parent=1 // pred_region
      %160 = dma.done [#allocation6], 128
    $region37: #{tpu_custom_call.1} parent=1 // pred_fallthru
      _
    // Predicated region
    $region38: #{tpu_custom_call.1} parent=1 // pred_check
      _
    $region39: #{tpu_custom_call.1} parent=1 // pred_check_branch
      %162 = sbr.rel (0) target = $region41
    $region40: #{tpu_custom_call.1} parent=1 // pred_region
      %163 = dma.done [#allocation11], 128
    $region41: #{tpu_custom_call.1} parent=1 // pred_fallthru
      _
    %164 = vsyncpa [#allocation5], 1
    %165 = vsyncpa [#allocation8], 1
    %166 = vsyncpa [#allocation6], 1
    %167 = vsyncpa [#allocation11], 1

</llo_original>
